<compile_context>
chip_gen: v5e
topology: v5e:2x2
jax: 0.10.0
libtpu: 0.0.40
codegen_flags: <defaults>
</compile_context>

<pallas_src>
import numpy as np
import jax
import jax.numpy as jnp
from jax import lax
from jax.experimental import pallas as pl
from jax.experimental.pallas import tpu as pltpu

TIME_BLOCK = 8  # timesteps per grid iteration


# ----------------------------- Pallas kernel --------------------------------
def make_lstm_kernel(tt, H):
    def lstm_kernel(gx_ref, len_ref, whh_ref, h0_ref, c0_ref,
                    h_out_ref, c_out_ref):
        tb = pl.program_id(0)

        # h_out/c_out have a constant block index -> they stay resident in
        # VMEM across grid steps and serve as the recurrent state.
        @pl.when(tb == 0)
        def _():
            h_out_ref[...] = h0_ref[...]
            c_out_ref[...] = c0_ref[...]

        lengths = len_ref[...]          # (B, 1) i32
        whh = whh_ref[...]              # (H, 4H)
        t0 = tb * tt

        def step(i, carry):
            h_prev, c_prev = carry
            # single fused matmul per step: (B,H) x (H,4H) -> (B,4H)
            gates = gx_ref[i] + jnp.dot(h_prev, whh,
                                        preferred_element_type=jnp.float32)
            i_g = jax.nn.sigmoid(gates[:, 0 * H:1 * H])
            f_g = jax.nn.sigmoid(gates[:, 1 * H:2 * H])
            g_g = jnp.tanh(gates[:, 2 * H:3 * H])
            o_g = jax.nn.sigmoid(gates[:, 3 * H:4 * H])
            c_new = f_g * c_prev + i_g * g_g
            h_new = o_g * jnp.tanh(c_new)
            # Freeze state once a sequence is past its length
            # (packed-sequence semantics). Padded steps (t >= max len) are
            # all-invalid, so zero padding of gx is harmless.
            valid = (t0 + i) < lengths      # (B, 1), broadcasts over H
            return (jnp.where(valid, h_new, h_prev),
                    jnp.where(valid, c_new, c_prev))

        h, c = lax.fori_loop(0, tt, step,
                             (h_out_ref[...], c_out_ref[...]), unroll=True)
        h_out_ref[...] = h
        c_out_ref[...] = c

    return lstm_kernel


def lstm_pallas(gx, lengths, h0, c0, w_hh, *, tt=TIME_BLOCK):
    """gx: (T_pad, B, 4H) with T_pad % tt == 0."""
    T_pad, B, G = gx.shape
    H = h0.shape[1]
    assert T_pad % tt == 0 and G == 4 * H
    lengths2d = lengths.reshape(B, 1).astype(jnp.int32)

    h_fin, c_fin = pl.pallas_call(
        make_lstm_kernel(tt, H),
        out_shape=(jax.ShapeDtypeStruct((B, H), jnp.float32),
                   jax.ShapeDtypeStruct((B, H), jnp.float32)),
        grid=(T_pad // tt,),
        in_specs=[
            pl.BlockSpec((tt, B, G), lambda t: (t, 0, 0)),   # gate pre-acts
            pl.BlockSpec((B, 1), lambda t: (0, 0)),          # lengths
            pl.BlockSpec((H, G), lambda t: (0, 0)),          # w_hh (fused)
            pl.BlockSpec((B, H), lambda t: (0, 0)),          # h0
            pl.BlockSpec((B, H), lambda t: (0, 0)),          # c0
        ],
        out_specs=(pl.BlockSpec((B, H), lambda t: (0, 0)),
                   pl.BlockSpec((B, H), lambda t: (0, 0))),
        compiler_params=pltpu.CompilerParams(
            dimension_semantics=("arbitrary",)),  # sequential recurrence
    )(gx, lengths2d, w_hh, h0, c0)
    return h_fin, c_fin


# ------------------------ Module wrapper (glue in JAX) -----------------------
class IncrementalRecurrenceSimplePallas:
    def __init__(self, input_emb_dim, output_emb_dim, num_layers=1, key=None):
        assert num_layers == 1  # TODO(synk): multi-layer LSTM stacking not implemented
        self.input_emb_dim = input_emb_dim
        self.output_emb_dim = output_emb_dim
        self.num_layers = num_layers
        D, H = input_emb_dim, output_emb_dim
        key = jax.random.PRNGKey(0) if key is None else key
        k1, k2 = jax.random.split(key)
        # xavier_normal on (4H, D) / (4H, H), bias = 0 (mirrors init_weights()).
        std_ih = float(np.sqrt(2.0 / (4 * H + D)))
        std_hh = float(np.sqrt(2.0 / (4 * H + H)))
        w_ih_full = jax.random.normal(k1, (4 * H, D), jnp.float32) * std_ih
        w_hh_full = jax.random.normal(k2, (4 * H, H), jnp.float32) * std_hh
        # Fused layouts: columns grouped by gate (i | f | g | o), each width H.
        self.w_ih = w_ih_full.T            # (D, 4H)
        self.w_hh = w_hh_full.T            # (H, 4H)
        self.b = jnp.zeros((4 * H,), jnp.float32)  # b_ih + b_hh, both zero
        # TODO(synk): optional bf16 weight/activation cast for large D/H (keep
        # f32 accumulation); kept f32 here to preserve tight f32 tolerances.

    def forward(self, image_seq_batch, seq_lengths, hidden_vectors):
        b, n, d = image_seq_batch.shape
        H = self.output_emb_dim
        lengths = [(int(l), i) for i, l in enumerate(np.asarray(seq_lengths))]
        lengths.sort(reverse=True)
        sort_idx = [i for _, i in lengths]
        sort_idx_reverse = [sort_idx.index(i) for i in range(len(sort_idx))]
        x_sorted = jnp.asarray(image_seq_batch)[np.array(sort_idx)]   # (B, N, D)
        lengths_sorted = np.array([l for l, _ in lengths], np.int32)

        if hidden_vectors is None:
            h0 = jnp.zeros((b, H), jnp.float32)
            c0 = jnp.zeros((b, H), jnp.float32)
        else:
            # NOTE: like the original module, hidden_vectors are applied to the
            # sorted batch order without reordering.
            h0 = hidden_vectors[0][0]
            c0 = hidden_vectors[1][0]

        t_run = int(lengths_sorted.max()) if lengths_sorted.size else 0
        if t_run == 0:
            # all-empty batch: state unchanged (kernel never writes outputs).
            h_fin, c_fin = h0, c0
        else:
            tt = min(TIME_BLOCK, max(t_run, 1))
            t_pad = ((t_run + tt - 1) // tt) * tt
            # time-major, only the timesteps that can matter
            x_tm = jnp.transpose(x_sorted[:, :t_run, :], (1, 0, 2)).astype(jnp.float32)
            # Hoisted input projection: one large (T*B, D) x (D, 4H) matmul.
            gx = (jnp.dot(x_tm.reshape(t_run * b, d), self.w_ih,
                          precision=lax.Precision.HIGHEST)
                  + self.b).reshape(t_run, b, 4 * H)
            if t_pad > t_run:
                gx = jnp.pad(gx, ((0, t_pad - t_run), (0, 0), (0, 0)))
            h_fin, c_fin = lstm_pallas(gx, jnp.asarray(lengths_sorted),
                                       h0, c0, self.w_hh, tt=tt)

        final_vectors = h_fin[np.array(sort_idx_reverse)]          # original order
        new_hidden = (h_fin[None, :, :], c_fin[None, :, :])        # sorted order
        return final_vectors, new_hidden


# ------------------------------ JAX reference --------------------------------
def lstm_ref_jax(x_tm, lengths, h0, c0, w_ih, w_hh, b):
    H = h0.shape[1]
    T = x_tm.shape[0]
    h, c = h0, c0
    for t in range(T):
        gates = (jnp.dot(x_tm[t], w_ih, precision=lax.Precision.HIGHEST)
                 + jnp.dot(h, w_hh, precision=lax.Precision.HIGHEST) + b)
        i = jax.nn.sigmoid(gates[:, 0 * H:1 * H])
        f = jax.nn.sigmoid(gates[:, 1 * H:2 * H])
        g = jnp.tanh(gates[:, 2 * H:3 * H])
        o = jax.nn.sigmoid(gates[:, 3 * H:4 * H])
        c_new = f * c + i * g
        h_new = o * jnp.tanh(c_new)
        valid = (t < lengths).reshape(-1, 1)
        h = jnp.where(valid, h_new, h)
        c = jnp.where(valid, c_new, c)
    return h, c


if __name__ == "__main__":
    B, N, D, H = 4, 8, 32, 32
    key = jax.random.PRNGKey(0)
    kx, kp = jax.random.split(key)
    image_seq_batch = jax.random.normal(kx, (B, N, D), jnp.float32)
    seq_lengths = np.array([5, 8, 3, 8], dtype=np.int32)

    module = IncrementalRecurrenceSimplePallas(D, H, num_layers=1, key=kp)
    final_vectors, new_hidden = module.forward(image_seq_batch, seq_lengths, None)
    jax.block_until_ready(final_vectors)
    jax.block_until_ready(new_hidden)

    # correctness check against a pure-JAX reference with identical sorting/masking
    lengths_sorted = [(int(l), i) for i, l in enumerate(seq_lengths)]
    lengths_sorted.sort(reverse=True)
    sort_idx = [i for _, i in lengths_sorted]
    sort_idx_reverse = [sort_idx.index(i) for i in range(len(sort_idx))]
    x_sorted = image_seq_batch[np.array(sort_idx)]
    x_tm = jnp.transpose(x_sorted, (1, 0, 2))
    lens = jnp.asarray([l for l, _ in lengths_sorted], jnp.int32)
    h_ref, c_ref = lstm_ref_jax(x_tm, lens,
                                jnp.zeros((B, H)), jnp.zeros((B, H)),
                                module.w_ih, module.w_hh, module.b)
    np.testing.assert_allclose(np.asarray(new_hidden[0][0]), np.asarray(h_ref),
                               rtol=1e-4, atol=1e-5)
    np.testing.assert_allclose(np.asarray(new_hidden[1][0]), np.asarray(c_ref),
                               rtol=1e-4, atol=1e-5)
    np.testing.assert_allclose(np.asarray(final_vectors),
                               np.asarray(h_ref)[np.array(sort_idx_reverse)],
                               rtol=1e-4, atol=1e-5)

    assert final_vectors.shape == (B, H)
    assert new_hidden[0].shape == (1, B, H) and new_hidden[1].shape == (1, B, H)
    print("KERNEL_OK")
</pallas_src>

<mosaic_0001>
module attributes {stable_mosaic.version = 11 : i64} {
  func.func @lstm_kernel(%arg0: i32, %arg1: memref<8x4x128xf32, #tpu.memory_space<vmem>>, %arg2: memref<4x1xi32, #tpu.memory_space<vmem>>, %arg3: memref<32x128xf32, #tpu.memory_space<vmem>>, %arg4: memref<4x32xf32, #tpu.memory_space<vmem>>, %arg5: memref<4x32xf32, #tpu.memory_space<vmem>>, %arg6: memref<4x32xf32, #tpu.memory_space<vmem>>, %arg7: memref<4x32xf32, #tpu.memory_space<vmem>>) attributes {dimension_semantics = [#tpu.dimension_semantics<arbitrary>], iteration_bounds = array<i64: 1>, scalar_prefetch = 0 : i64, scratch_operands = 0 : i64, tpu.core_type = #tpu.core_type<tc>, window_params = [{transform_indices = @transform_0, window_bounds = array<i64: 8, 4, 128>}, {pipeline_mode = #tpu.pipeline_mode<synchronous>, transform_indices = @transform_1, window_bounds = array<i64: 4, 1>}, {pipeline_mode = #tpu.pipeline_mode<synchronous>, transform_indices = @transform_2, window_bounds = array<i64: 32, 128>}, {pipeline_mode = #tpu.pipeline_mode<synchronous>, transform_indices = @transform_3, window_bounds = array<i64: 4, 32>}, {pipeline_mode = #tpu.pipeline_mode<synchronous>, transform_indices = @transform_4, window_bounds = array<i64: 4, 32>}, {pipeline_mode = #tpu.pipeline_mode<synchronous>, transform_indices = @transform_5, window_bounds = array<i64: 4, 32>}, {pipeline_mode = #tpu.pipeline_mode<synchronous>, transform_indices = @transform_6, window_bounds = array<i64: 4, 32>}]} {
    %c0_i32 = arith.constant 0 : i32
    %0 = arith.cmpi eq, %arg0, %c0_i32 : i32
    %1 = arith.extui %0 : i1 to i32
    %c0_i32_0 = arith.constant 0 : i32
    %2 = arith.cmpi ne, %1, %c0_i32_0 : i32
    scf.if %2 {
      %c0_61 = arith.constant 0 : index
      %c0_62 = arith.constant 0 : index
      %322 = vector.load %arg4[%c0_61, %c0_62] : memref<4x32xf32, #tpu.memory_space<vmem>>, vector<4x32xf32>
      %c0_63 = arith.constant 0 : index
      %c0_64 = arith.constant 0 : index
      %323 = vector.load %arg6[%c0_63, %c0_64] : memref<4x32xf32, #tpu.memory_space<vmem>>, vector<4x32xf32>
      tpu.vector_store %arg6[%c0_63, %c0_64], %322 {strides = array<i32>} : memref<4x32xf32, #tpu.memory_space<vmem>>, vector<4x32xf32>,
      %c0_65 = arith.constant 0 : index
      %c0_66 = arith.constant 0 : index
      %324 = vector.load %arg5[%c0_65, %c0_66] : memref<4x32xf32, #tpu.memory_space<vmem>>, vector<4x32xf32>
      %c0_67 = arith.constant 0 : index
      %c0_68 = arith.constant 0 : index
      %325 = vector.load %arg7[%c0_67, %c0_68] : memref<4x32xf32, #tpu.memory_space<vmem>>, vector<4x32xf32>
      tpu.vector_store %arg7[%c0_67, %c0_68], %324 {strides = array<i32>} : memref<4x32xf32, #tpu.memory_space<vmem>>, vector<4x32xf32>,
    } else {
    }
    %c0 = arith.constant 0 : index
    %c0_1 = arith.constant 0 : index
    %3 = vector.load %arg2[%c0, %c0_1] : memref<4x1xi32, #tpu.memory_space<vmem>>, vector<4x1xi32>
    %c0_2 = arith.constant 0 : index
    %c0_3 = arith.constant 0 : index
    %4 = vector.load %arg3[%c0_2, %c0_3] : memref<32x128xf32, #tpu.memory_space<vmem>>, vector<32x128xf32>
    %c8_i32 = arith.constant 8 : i32
    %5 = arith.muli %arg0, %c8_i32 : i32
    %c0_4 = arith.constant 0 : index
    %c0_5 = arith.constant 0 : index
    %6 = vector.load %arg6[%c0_4, %c0_5] : memref<4x32xf32, #tpu.memory_space<vmem>>, vector<4x32xf32>
    %c0_6 = arith.constant 0 : index
    %c0_7 = arith.constant 0 : index
    %7 = vector.load %arg7[%c0_6, %c0_7] : memref<4x32xf32, #tpu.memory_space<vmem>>, vector<4x32xf32>
    %c0_i32_8 = arith.constant 0 : i32
    %8 = arith.index_cast %c0_i32_8 : i32 to index
    %c0_9 = arith.constant 0 : index
    %c0_10 = arith.constant 0 : index
    %9 = vector.load %arg1[%8, %c0_9, %c0_10] : memref<8x4x128xf32, #tpu.memory_space<vmem>>, vector<1x4x128xf32>
    %10 = vector.shape_cast %9 : vector<1x4x128xf32> to vector<4x128xf32>
    %cst = arith.constant dense<0.000000e+00> : vector<4x128xf32>
    %11 = tpu.matmul %6, %4, %cst {dimension_numbers = #tpu.dot_dimension_numbers<[1], [0], [0], [1], [0, 0, 1, 1], [], []>} : vector<4x32xf32>, vector<32x128xf32>, vector<4x128xf32> -> vector<4x128xf32>
    %12 = arith.addf %10, %11 : vector<4x128xf32>
    %13 = vector.extract_strided_slice %12 {offsets = [0, 0], sizes = [4, 32], strides = [1, 1]} : vector<4x128xf32> to vector<4x32xf32>
    %14 = arith.negf %13 : vector<4x32xf32>
    %15 = math.exp %14 : vector<4x32xf32>
    %cst_11 = arith.constant 1.000000e+00 : f32
    %16 = vector.broadcast %cst_11 : f32 to vector<4x32xf32>
    %17 = arith.addf %16, %15 : vector<4x32xf32>
    %18 = arith.divf %16, %17 : vector<4x32xf32>
    %19 = vector.extract_strided_slice %12 {offsets = [0, 32], sizes = [4, 32], strides = [1, 1]} : vector<4x128xf32> to vector<4x32xf32>
    %20 = arith.negf %19 : vector<4x32xf32>
    %21 = math.exp %20 : vector<4x32xf32>
    %cst_12 = arith.constant 1.000000e+00 : f32
    %22 = vector.broadcast %cst_12 : f32 to vector<4x32xf32>
    %23 = arith.addf %22, %21 : vector<4x32xf32>
    %24 = arith.divf %22, %23 : vector<4x32xf32>
    %25 = vector.extract_strided_slice %12 {offsets = [0, 64], sizes = [4, 32], strides = [1, 1]} : vector<4x128xf32> to vector<4x32xf32>
    %26 = math.tanh %25 : vector<4x32xf32>
    %27 = vector.extract_strided_slice %12 {offsets = [0, 96], sizes = [4, 32], strides = [1, 1]} : vector<4x128xf32> to vector<4x32xf32>
    %28 = arith.negf %27 : vector<4x32xf32>
    %29 = math.exp %28 : vector<4x32xf32>
    %cst_13 = arith.constant 1.000000e+00 : f32
    %30 = vector.broadcast %cst_13 : f32 to vector<4x32xf32>
    %31 = arith.addf %30, %29 : vector<4x32xf32>
    %32 = arith.divf %30, %31 : vector<4x32xf32>
    %33 = arith.mulf %24, %7 : vector<4x32xf32>
    %34 = arith.mulf %18, %26 : vector<4x32xf32>
    %35 = arith.addf %33, %34 : vector<4x32xf32>
    %36 = math.tanh %35 : vector<4x32xf32>
    %37 = arith.mulf %32, %36 : vector<4x32xf32>
    %38 = arith.addi %5, %c0_i32_8 : i32
    %39 = vector.broadcast %38 : i32 to vector<4x1xi32>
    %40 = arith.cmpi slt, %39, %3 : vector<4x1xi32>
    %41 = vector.shape_cast %40 : vector<4x1xi1> to vector<4x1xi1>
    %42 = vector.broadcast %41 : vector<4x1xi1> to vector<4x32xi1>
    %43 = arith.select %42, %37, %6 : vector<4x32xi1>, vector<4x32xf32>
    %44 = vector.shape_cast %40 : vector<4x1xi1> to vector<4x1xi1>
    %45 = vector.broadcast %44 : vector<4x1xi1> to vector<4x32xi1>
    %46 = arith.select %45, %35, %7 : vector<4x32xi1>, vector<4x32xf32>
    %c1_i32 = arith.constant 1 : i32
    %47 = arith.index_cast %c1_i32 : i32 to index
    %c0_14 = arith.constant 0 : index
    %c0_15 = arith.constant 0 : index
    %48 = vector.load %arg1[%47, %c0_14, %c0_15] : memref<8x4x128xf32, #tpu.memory_space<vmem>>, vector<1x4x128xf32>
    %49 = vector.shape_cast %48 : vector<1x4x128xf32> to vector<4x128xf32>
    %cst_16 = arith.constant dense<0.000000e+00> : vector<4x128xf32>
    %50 = tpu.matmul %43, %4, %cst_16 {dimension_numbers = #tpu.dot_dimension_numbers<[1], [0], [0], [1], [0, 0, 1, 1], [], []>} : vector<4x32xf32>, vector<32x128xf32>, vector<4x128xf32> -> vector<4x128xf32>
    %51 = arith.addf %49, %50 : vector<4x128xf32>
    %52 = vector.extract_strided_slice %51 {offsets = [0, 0], sizes = [4, 32], strides = [1, 1]} : vector<4x128xf32> to vector<4x32xf32>
    %53 = arith.negf %52 : vector<4x32xf32>
    %54 = math.exp %53 : vector<4x32xf32>
    %cst_17 = arith.constant 1.000000e+00 : f32
    %55 = vector.broadcast %cst_17 : f32 to vector<4x32xf32>
    %56 = arith.addf %55, %54 : vector<4x32xf32>
    %57 = arith.divf %55, %56 : vector<4x32xf32>
    %58 = vector.extract_strided_slice %51 {offsets = [0, 32], sizes = [4, 32], strides = [1, 1]} : vector<4x128xf32> to vector<4x32xf32>
    %59 = arith.negf %58 : vector<4x32xf32>
    %60 = math.exp %59 : vector<4x32xf32>
    %cst_18 = arith.constant 1.000000e+00 : f32
    %61 = vector.broadcast %cst_18 : f32 to vector<4x32xf32>
    %62 = arith.addf %61, %60 : vector<4x32xf32>
    %63 = arith.divf %61, %62 : vector<4x32xf32>
    %64 = vector.extract_strided_slice %51 {offsets = [0, 64], sizes = [4, 32], strides = [1, 1]} : vector<4x128xf32> to vector<4x32xf32>
    %65 = math.tanh %64 : vector<4x32xf32>
    %66 = vector.extract_strided_slice %51 {offsets = [0, 96], sizes = [4, 32], strides = [1, 1]} : vector<4x128xf32> to vector<4x32xf32>
    %67 = arith.negf %66 : vector<4x32xf32>
    %68 = math.exp %67 : vector<4x32xf32>
    %cst_19 = arith.constant 1.000000e+00 : f32
    %69 = vector.broadcast %cst_19 : f32 to vector<4x32xf32>
    %70 = arith.addf %69, %68 : vector<4x32xf32>
    %71 = arith.divf %69, %70 : vector<4x32xf32>
    %72 = arith.mulf %63, %46 : vector<4x32xf32>
    %73 = arith.mulf %57, %65 : vector<4x32xf32>
    %74 = arith.addf %72, %73 : vector<4x32xf32>
    %75 = math.tanh %74 : vector<4x32xf32>
    %76 = arith.mulf %71, %75 : vector<4x32xf32>
    %77 = arith.addi %5, %c1_i32 : i32
    %78 = vector.broadcast %77 : i32 to vector<4x1xi32>
    %79 = arith.cmpi slt, %78, %3 : vector<4x1xi32>
    %80 = vector.shape_cast %79 : vector<4x1xi1> to vector<4x1xi1>
    %81 = vector.broadcast %80 : vector<4x1xi1> to vector<4x32xi1>
    %82 = arith.select %81, %76, %43 : vector<4x32xi1>, vector<4x32xf32>
    %83 = vector.shape_cast %79 : vector<4x1xi1> to vector<4x1xi1>
    %84 = vector.broadcast %83 : vector<4x1xi1> to vector<4x32xi1>
    %85 = arith.select %84, %74, %46 : vector<4x32xi1>, vector<4x32xf32>
    %c2_i32 = arith.constant 2 : i32
    %86 = arith.index_cast %c2_i32 : i32 to index
    %c0_20 = arith.constant 0 : index
    %c0_21 = arith.constant 0 : index
    %87 = vector.load %arg1[%86, %c0_20, %c0_21] : memref<8x4x128xf32, #tpu.memory_space<vmem>>, vector<1x4x128xf32>
    %88 = vector.shape_cast %87 : vector<1x4x128xf32> to vector<4x128xf32>
    %cst_22 = arith.constant dense<0.000000e+00> : vector<4x128xf32>
    %89 = tpu.matmul %82, %4, %cst_22 {dimension_numbers = #tpu.dot_dimension_numbers<[1], [0], [0], [1], [0, 0, 1, 1], [], []>} : vector<4x32xf32>, vector<32x128xf32>, vector<4x128xf32> -> vector<4x128xf32>
    %90 = arith.addf %88, %89 : vector<4x128xf32>
    %91 = vector.extract_strided_slice %90 {offsets = [0, 0], sizes = [4, 32], strides = [1, 1]} : vector<4x128xf32> to vector<4x32xf32>
    %92 = arith.negf %91 : vector<4x32xf32>
    %93 = math.exp %92 : vector<4x32xf32>
    %cst_23 = arith.constant 1.000000e+00 : f32
    %94 = vector.broadcast %cst_23 : f32 to vector<4x32xf32>
    %95 = arith.addf %94, %93 : vector<4x32xf32>
    %96 = arith.divf %94, %95 : vector<4x32xf32>
    %97 = vector.extract_strided_slice %90 {offsets = [0, 32], sizes = [4, 32], strides = [1, 1]} : vector<4x128xf32> to vector<4x32xf32>
    %98 = arith.negf %97 : vector<4x32xf32>
    %99 = math.exp %98 : vector<4x32xf32>
    %cst_24 = arith.constant 1.000000e+00 : f32
    %100 = vector.broadcast %cst_24 : f32 to vector<4x32xf32>
    %101 = arith.addf %100, %99 : vector<4x32xf32>
    %102 = arith.divf %100, %101 : vector<4x32xf32>
    %103 = vector.extract_strided_slice %90 {offsets = [0, 64], sizes = [4, 32], strides = [1, 1]} : vector<4x128xf32> to vector<4x32xf32>
    %104 = math.tanh %103 : vector<4x32xf32>
    %105 = vector.extract_strided_slice %90 {offsets = [0, 96], sizes = [4, 32], strides = [1, 1]} : vector<4x128xf32> to vector<4x32xf32>
    %106 = arith.negf %105 : vector<4x32xf32>
    %107 = math.exp %106 : vector<4x32xf32>
    %cst_25 = arith.constant 1.000000e+00 : f32
    %108 = vector.broadcast %cst_25 : f32 to vector<4x32xf32>
    %109 = arith.addf %108, %107 : vector<4x32xf32>
    %110 = arith.divf %108, %109 : vector<4x32xf32>
    %111 = arith.mulf %102, %85 : vector<4x32xf32>
    %112 = arith.mulf %96, %104 : vector<4x32xf32>
    %113 = arith.addf %111, %112 : vector<4x32xf32>
    %114 = math.tanh %113 : vector<4x32xf32>
    %115 = arith.mulf %110, %114 : vector<4x32xf32>
    %116 = arith.addi %5, %c2_i32 : i32
    %117 = vector.broadcast %116 : i32 to vector<4x1xi32>
    %118 = arith.cmpi slt, %117, %3 : vector<4x1xi32>
    %119 = vector.shape_cast %118 : vector<4x1xi1> to vector<4x1xi1>
    %120 = vector.broadcast %119 : vector<4x1xi1> to vector<4x32xi1>
    %121 = arith.select %120, %115, %82 : vector<4x32xi1>, vector<4x32xf32>
    %122 = vector.shape_cast %118 : vector<4x1xi1> to vector<4x1xi1>
    %123 = vector.broadcast %122 : vector<4x1xi1> to vector<4x32xi1>
    %124 = arith.select %123, %113, %85 : vector<4x32xi1>, vector<4x32xf32>
    %c3_i32 = arith.constant 3 : i32
    %125 = arith.index_cast %c3_i32 : i32 to index
    %c0_26 = arith.constant 0 : index
    %c0_27 = arith.constant 0 : index
    %126 = vector.load %arg1[%125, %c0_26, %c0_27] : memref<8x4x128xf32, #tpu.memory_space<vmem>>, vector<1x4x128xf32>
    %127 = vector.shape_cast %126 : vector<1x4x128xf32> to vector<4x128xf32>
    %cst_28 = arith.constant dense<0.000000e+00> : vector<4x128xf32>
    %128 = tpu.matmul %121, %4, %cst_28 {dimension_numbers = #tpu.dot_dimension_numbers<[1], [0], [0], [1], [0, 0, 1, 1], [], []>} : vector<4x32xf32>, vector<32x128xf32>, vector<4x128xf32> -> vector<4x128xf32>
    %129 = arith.addf %127, %128 : vector<4x128xf32>
    %130 = vector.extract_strided_slice %129 {offsets = [0, 0], sizes = [4, 32], strides = [1, 1]} : vector<4x128xf32> to vector<4x32xf32>
    %131 = arith.negf %130 : vector<4x32xf32>
    %132 = math.exp %131 : vector<4x32xf32>
    %cst_29 = arith.constant 1.000000e+00 : f32
    %133 = vector.broadcast %cst_29 : f32 to vector<4x32xf32>
    %134 = arith.addf %133, %132 : vector<4x32xf32>
    %135 = arith.divf %133, %134 : vector<4x32xf32>
    %136 = vector.extract_strided_slice %129 {offsets = [0, 32], sizes = [4, 32], strides = [1, 1]} : vector<4x128xf32> to vector<4x32xf32>
    %137 = arith.negf %136 : vector<4x32xf32>
    %138 = math.exp %137 : vector<4x32xf32>
    %cst_30 = arith.constant 1.000000e+00 : f32
    %139 = vector.broadcast %cst_30 : f32 to vector<4x32xf32>
    %140 = arith.addf %139, %138 : vector<4x32xf32>
    %141 = arith.divf %139, %140 : vector<4x32xf32>
    %142 = vector.extract_strided_slice %129 {offsets = [0, 64], sizes = [4, 32], strides = [1, 1]} : vector<4x128xf32> to vector<4x32xf32>
    %143 = math.tanh %142 : vector<4x32xf32>
    %144 = vector.extract_strided_slice %129 {offsets = [0, 96], sizes = [4, 32], strides = [1, 1]} : vector<4x128xf32> to vector<4x32xf32>
    %145 = arith.negf %144 : vector<4x32xf32>
    %146 = math.exp %145 : vector<4x32xf32>
    %cst_31 = arith.constant 1.000000e+00 : f32
    %147 = vector.broadcast %cst_31 : f32 to vector<4x32xf32>
    %148 = arith.addf %147, %146 : vector<4x32xf32>
    %149 = arith.divf %147, %148 : vector<4x32xf32>
    %150 = arith.mulf %141, %124 : vector<4x32xf32>
    %151 = arith.mulf %135, %143 : vector<4x32xf32>
    %152 = arith.addf %150, %151 : vector<4x32xf32>
    %153 = math.tanh %152 : vector<4x32xf32>
    %154 = arith.mulf %149, %153 : vector<4x32xf32>
    %155 = arith.addi %5, %c3_i32 : i32
    %156 = vector.broadcast %155 : i32 to vector<4x1xi32>
    %157 = arith.cmpi slt, %156, %3 : vector<4x1xi32>
    %158 = vector.shape_cast %157 : vector<4x1xi1> to vector<4x1xi1>
    %159 = vector.broadcast %158 : vector<4x1xi1> to vector<4x32xi1>
    %160 = arith.select %159, %154, %121 : vector<4x32xi1>, vector<4x32xf32>
    %161 = vector.shape_cast %157 : vector<4x1xi1> to vector<4x1xi1>
    %162 = vector.broadcast %161 : vector<4x1xi1> to vector<4x32xi1>
    %163 = arith.select %162, %152, %124 : vector<4x32xi1>, vector<4x32xf32>
    %c4_i32 = arith.constant 4 : i32
    %164 = arith.index_cast %c4_i32 : i32 to index
    %c0_32 = arith.constant 0 : index
    %c0_33 = arith.constant 0 : index
    %165 = vector.load %arg1[%164, %c0_32, %c0_33] : memref<8x4x128xf32, #tpu.memory_space<vmem>>, vector<1x4x128xf32>
    %166 = vector.shape_cast %165 : vector<1x4x128xf32> to vector<4x128xf32>
    %cst_34 = arith.constant dense<0.000000e+00> : vector<4x128xf32>
    %167 = tpu.matmul %160, %4, %cst_34 {dimension_numbers = #tpu.dot_dimension_numbers<[1], [0], [0], [1], [0, 0, 1, 1], [], []>} : vector<4x32xf32>, vector<32x128xf32>, vector<4x128xf32> -> vector<4x128xf32>
    %168 = arith.addf %166, %167 : vector<4x128xf32>
    %169 = vector.extract_strided_slice %168 {offsets = [0, 0], sizes = [4, 32], strides = [1, 1]} : vector<4x128xf32> to vector<4x32xf32>
    %170 = arith.negf %169 : vector<4x32xf32>
    %171 = math.exp %170 : vector<4x32xf32>
    %cst_35 = arith.constant 1.000000e+00 : f32
    %172 = vector.broadcast %cst_35 : f32 to vector<4x32xf32>
    %173 = arith.addf %172, %171 : vector<4x32xf32>
    %174 = arith.divf %172, %173 : vector<4x32xf32>
    %175 = vector.extract_strided_slice %168 {offsets = [0, 32], sizes = [4, 32], strides = [1, 1]} : vector<4x128xf32> to vector<4x32xf32>
    %176 = arith.negf %175 : vector<4x32xf32>
    %177 = math.exp %176 : vector<4x32xf32>
    %cst_36 = arith.constant 1.000000e+00 : f32
    %178 = vector.broadcast %cst_36 : f32 to vector<4x32xf32>
    %179 = arith.addf %178, %177 : vector<4x32xf32>
    %180 = arith.divf %178, %179 : vector<4x32xf32>
    %181 = vector.extract_strided_slice %168 {offsets = [0, 64], sizes = [4, 32], strides = [1, 1]} : vector<4x128xf32> to vector<4x32xf32>
    %182 = math.tanh %181 : vector<4x32xf32>
    %183 = vector.extract_strided_slice %168 {offsets = [0, 96], sizes = [4, 32], strides = [1, 1]} : vector<4x128xf32> to vector<4x32xf32>
    %184 = arith.negf %183 : vector<4x32xf32>
    %185 = math.exp %184 : vector<4x32xf32>
    %cst_37 = arith.constant 1.000000e+00 : f32
    %186 = vector.broadcast %cst_37 : f32 to vector<4x32xf32>
    %187 = arith.addf %186, %185 : vector<4x32xf32>
    %188 = arith.divf %186, %187 : vector<4x32xf32>
    %189 = arith.mulf %180, %163 : vector<4x32xf32>
    %190 = arith.mulf %174, %182 : vector<4x32xf32>
    %191 = arith.addf %189, %190 : vector<4x32xf32>
    %192 = math.tanh %191 : vector<4x32xf32>
    %193 = arith.mulf %188, %192 : vector<4x32xf32>
    %194 = arith.addi %5, %c4_i32 : i32
    %195 = vector.broadcast %194 : i32 to vector<4x1xi32>
    %196 = arith.cmpi slt, %195, %3 : vector<4x1xi32>
    %197 = vector.shape_cast %196 : vector<4x1xi1> to vector<4x1xi1>
    %198 = vector.broadcast %197 : vector<4x1xi1> to vector<4x32xi1>
    %199 = arith.select %198, %193, %160 : vector<4x32xi1>, vector<4x32xf32>
    %200 = vector.shape_cast %196 : vector<4x1xi1> to vector<4x1xi1>
    %201 = vector.broadcast %200 : vector<4x1xi1> to vector<4x32xi1>
    %202 = arith.select %201, %191, %163 : vector<4x32xi1>, vector<4x32xf32>
    %c5_i32 = arith.constant 5 : i32
    %203 = arith.index_cast %c5_i32 : i32 to index
    %c0_38 = arith.constant 0 : index
    %c0_39 = arith.constant 0 : index
    %204 = vector.load %arg1[%203, %c0_38, %c0_39] : memref<8x4x128xf32, #tpu.memory_space<vmem>>, vector<1x4x128xf32>
    %205 = vector.shape_cast %204 : vector<1x4x128xf32> to vector<4x128xf32>
    %cst_40 = arith.constant dense<0.000000e+00> : vector<4x128xf32>
    %206 = tpu.matmul %199, %4, %cst_40 {dimension_numbers = #tpu.dot_dimension_numbers<[1], [0], [0], [1], [0, 0, 1, 1], [], []>} : vector<4x32xf32>, vector<32x128xf32>, vector<4x128xf32> -> vector<4x128xf32>
    %207 = arith.addf %205, %206 : vector<4x128xf32>
    %208 = vector.extract_strided_slice %207 {offsets = [0, 0], sizes = [4, 32], strides = [1, 1]} : vector<4x128xf32> to vector<4x32xf32>
    %209 = arith.negf %208 : vector<4x32xf32>
    %210 = math.exp %209 : vector<4x32xf32>
    %cst_41 = arith.constant 1.000000e+00 : f32
    %211 = vector.broadcast %cst_41 : f32 to vector<4x32xf32>
    %212 = arith.addf %211, %210 : vector<4x32xf32>
    %213 = arith.divf %211, %212 : vector<4x32xf32>
    %214 = vector.extract_strided_slice %207 {offsets = [0, 32], sizes = [4, 32], strides = [1, 1]} : vector<4x128xf32> to vector<4x32xf32>
    %215 = arith.negf %214 : vector<4x32xf32>
    %216 = math.exp %215 : vector<4x32xf32>
    %cst_42 = arith.constant 1.000000e+00 : f32
    %217 = vector.broadcast %cst_42 : f32 to vector<4x32xf32>
    %218 = arith.addf %217, %216 : vector<4x32xf32>
    %219 = arith.divf %217, %218 : vector<4x32xf32>
    %220 = vector.extract_strided_slice %207 {offsets = [0, 64], sizes = [4, 32], strides = [1, 1]} : vector<4x128xf32> to vector<4x32xf32>
    %221 = math.tanh %220 : vector<4x32xf32>
    %222 = vector.extract_strided_slice %207 {offsets = [0, 96], sizes = [4, 32], strides = [1, 1]} : vector<4x128xf32> to vector<4x32xf32>
    %223 = arith.negf %222 : vector<4x32xf32>
    %224 = math.exp %223 : vector<4x32xf32>
    %cst_43 = arith.constant 1.000000e+00 : f32
    %225 = vector.broadcast %cst_43 : f32 to vector<4x32xf32>
    %226 = arith.addf %225, %224 : vector<4x32xf32>
    %227 = arith.divf %225, %226 : vector<4x32xf32>
    %228 = arith.mulf %219, %202 : vector<4x32xf32>
    %229 = arith.mulf %213, %221 : vector<4x32xf32>
    %230 = arith.addf %228, %229 : vector<4x32xf32>
    %231 = math.tanh %230 : vector<4x32xf32>
    %232 = arith.mulf %227, %231 : vector<4x32xf32>
    %233 = arith.addi %5, %c5_i32 : i32
    %234 = vector.broadcast %233 : i32 to vector<4x1xi32>
    %235 = arith.cmpi slt, %234, %3 : vector<4x1xi32>
    %236 = vector.shape_cast %235 : vector<4x1xi1> to vector<4x1xi1>
    %237 = vector.broadcast %236 : vector<4x1xi1> to vector<4x32xi1>
    %238 = arith.select %237, %232, %199 : vector<4x32xi1>, vector<4x32xf32>
    %239 = vector.shape_cast %235 : vector<4x1xi1> to vector<4x1xi1>
    %240 = vector.broadcast %239 : vector<4x1xi1> to vector<4x32xi1>
    %241 = arith.select %240, %230, %202 : vector<4x32xi1>, vector<4x32xf32>
    %c6_i32 = arith.constant 6 : i32
    %242 = arith.index_cast %c6_i32 : i32 to index
    %c0_44 = arith.constant 0 : index
    %c0_45 = arith.constant 0 : index
    %243 = vector.load %arg1[%242, %c0_44, %c0_45] : memref<8x4x128xf32, #tpu.memory_space<vmem>>, vector<1x4x128xf32>
    %244 = vector.shape_cast %243 : vector<1x4x128xf32> to vector<4x128xf32>
    %cst_46 = arith.constant dense<0.000000e+00> : vector<4x128xf32>
    %245 = tpu.matmul %238, %4, %cst_46 {dimension_numbers = #tpu.dot_dimension_numbers<[1], [0], [0], [1], [0, 0, 1, 1], [], []>} : vector<4x32xf32>, vector<32x128xf32>, vector<4x128xf32> -> vector<4x128xf32>
    %246 = arith.addf %244, %245 : vector<4x128xf32>
    %247 = vector.extract_strided_slice %246 {offsets = [0, 0], sizes = [4, 32], strides = [1, 1]} : vector<4x128xf32> to vector<4x32xf32>
    %248 = arith.negf %247 : vector<4x32xf32>
    %249 = math.exp %248 : vector<4x32xf32>
    %cst_47 = arith.constant 1.000000e+00 : f32
    %250 = vector.broadcast %cst_47 : f32 to vector<4x32xf32>
    %251 = arith.addf %250, %249 : vector<4x32xf32>
    %252 = arith.divf %250, %251 : vector<4x32xf32>
    %253 = vector.extract_strided_slice %246 {offsets = [0, 32], sizes = [4, 32], strides = [1, 1]} : vector<4x128xf32> to vector<4x32xf32>
    %254 = arith.negf %253 : vector<4x32xf32>
    %255 = math.exp %254 : vector<4x32xf32>
    %cst_48 = arith.constant 1.000000e+00 : f32
    %256 = vector.broadcast %cst_48 : f32 to vector<4x32xf32>
    %257 = arith.addf %256, %255 : vector<4x32xf32>
    %258 = arith.divf %256, %257 : vector<4x32xf32>
    %259 = vector.extract_strided_slice %246 {offsets = [0, 64], sizes = [4, 32], strides = [1, 1]} : vector<4x128xf32> to vector<4x32xf32>
    %260 = math.tanh %259 : vector<4x32xf32>
    %261 = vector.extract_strided_slice %246 {offsets = [0, 96], sizes = [4, 32], strides = [1, 1]} : vector<4x128xf32> to vector<4x32xf32>
    %262 = arith.negf %261 : vector<4x32xf32>
    %263 = math.exp %262 : vector<4x32xf32>
    %cst_49 = arith.constant 1.000000e+00 : f32
    %264 = vector.broadcast %cst_49 : f32 to vector<4x32xf32>
    %265 = arith.addf %264, %263 : vector<4x32xf32>
    %266 = arith.divf %264, %265 : vector<4x32xf32>
    %267 = arith.mulf %258, %241 : vector<4x32xf32>
    %268 = arith.mulf %252, %260 : vector<4x32xf32>
    %269 = arith.addf %267, %268 : vector<4x32xf32>
    %270 = math.tanh %269 : vector<4x32xf32>
    %271 = arith.mulf %266, %270 : vector<4x32xf32>
    %272 = arith.addi %5, %c6_i32 : i32
    %273 = vector.broadcast %272 : i32 to vector<4x1xi32>
    %274 = arith.cmpi slt, %273, %3 : vector<4x1xi32>
    %275 = vector.shape_cast %274 : vector<4x1xi1> to vector<4x1xi1>
    %276 = vector.broadcast %275 : vector<4x1xi1> to vector<4x32xi1>
    %277 = arith.select %276, %271, %238 : vector<4x32xi1>, vector<4x32xf32>
    %278 = vector.shape_cast %274 : vector<4x1xi1> to vector<4x1xi1>
    %279 = vector.broadcast %278 : vector<4x1xi1> to vector<4x32xi1>
    %280 = arith.select %279, %269, %241 : vector<4x32xi1>, vector<4x32xf32>
    %c7_i32 = arith.constant 7 : i32
    %281 = arith.index_cast %c7_i32 : i32 to index
    %c0_50 = arith.constant 0 : index
    %c0_51 = arith.constant 0 : index
    %282 = vector.load %arg1[%281, %c0_50, %c0_51] : memref<8x4x128xf32, #tpu.memory_space<vmem>>, vector<1x4x128xf32>
    %283 = vector.shape_cast %282 : vector<1x4x128xf32> to vector<4x128xf32>
    %cst_52 = arith.constant dense<0.000000e+00> : vector<4x128xf32>
    %284 = tpu.matmul %277, %4, %cst_52 {dimension_numbers = #tpu.dot_dimension_numbers<[1], [0], [0], [1], [0, 0, 1, 1], [], []>} : vector<4x32xf32>, vector<32x128xf32>, vector<4x128xf32> -> vector<4x128xf32>
    %285 = arith.addf %283, %284 : vector<4x128xf32>
    %286 = vector.extract_strided_slice %285 {offsets = [0, 0], sizes = [4, 32], strides = [1, 1]} : vector<4x128xf32> to vector<4x32xf32>
    %287 = arith.negf %286 : vector<4x32xf32>
    %288 = math.exp %287 : vector<4x32xf32>
    %cst_53 = arith.constant 1.000000e+00 : f32
    %289 = vector.broadcast %cst_53 : f32 to vector<4x32xf32>
    %290 = arith.addf %289, %288 : vector<4x32xf32>
    %291 = arith.divf %289, %290 : vector<4x32xf32>
    %292 = vector.extract_strided_slice %285 {offsets = [0, 32], sizes = [4, 32], strides = [1, 1]} : vector<4x128xf32> to vector<4x32xf32>
    %293 = arith.negf %292 : vector<4x32xf32>
    %294 = math.exp %293 : vector<4x32xf32>
    %cst_54 = arith.constant 1.000000e+00 : f32
    %295 = vector.broadcast %cst_54 : f32 to vector<4x32xf32>
    %296 = arith.addf %295, %294 : vector<4x32xf32>
    %297 = arith.divf %295, %296 : vector<4x32xf32>
    %298 = vector.extract_strided_slice %285 {offsets = [0, 64], sizes = [4, 32], strides = [1, 1]} : vector<4x128xf32> to vector<4x32xf32>
    %299 = math.tanh %298 : vector<4x32xf32>
    %300 = vector.extract_strided_slice %285 {offsets = [0, 96], sizes = [4, 32], strides = [1, 1]} : vector<4x128xf32> to vector<4x32xf32>
    %301 = arith.negf %300 : vector<4x32xf32>
    %302 = math.exp %301 : vector<4x32xf32>
    %cst_55 = arith.constant 1.000000e+00 : f32
    %303 = vector.broadcast %cst_55 : f32 to vector<4x32xf32>
    %304 = arith.addf %303, %302 : vector<4x32xf32>
    %305 = arith.divf %303, %304 : vector<4x32xf32>
    %306 = arith.mulf %297, %280 : vector<4x32xf32>
    %307 = arith.mulf %291, %299 : vector<4x32xf32>
    %308 = arith.addf %306, %307 : vector<4x32xf32>
    %309 = math.tanh %308 : vector<4x32xf32>
    %310 = arith.mulf %305, %309 : vector<4x32xf32>
    %311 = arith.addi %5, %c7_i32 : i32
    %312 = vector.broadcast %311 : i32 to vector<4x1xi32>
    %313 = arith.cmpi slt, %312, %3 : vector<4x1xi32>
    %314 = vector.shape_cast %313 : vector<4x1xi1> to vector<4x1xi1>
    %315 = vector.broadcast %314 : vector<4x1xi1> to vector<4x32xi1>
    %316 = arith.select %315, %310, %277 : vector<4x32xi1>, vector<4x32xf32>
    %317 = vector.shape_cast %313 : vector<4x1xi1> to vector<4x1xi1>
    %318 = vector.broadcast %317 : vector<4x1xi1> to vector<4x32xi1>
    %319 = arith.select %318, %308, %280 : vector<4x32xi1>, vector<4x32xf32>
    %c8_i32_56 = arith.constant 8 : i32
    %c0_57 = arith.constant 0 : index
    %c0_58 = arith.constant 0 : index
    %320 = vector.load %arg6[%c0_57, %c0_58] : memref<4x32xf32, #tpu.memory_space<vmem>>, vector<4x32xf32>
    tpu.vector_store %arg6[%c0_57, %c0_58], %316 {strides = array<i32>} : memref<4x32xf32, #tpu.memory_space<vmem>>, vector<4x32xf32>,
    %c0_59 = arith.constant 0 : index
    %c0_60 = arith.constant 0 : index
    %321 = vector.load %arg7[%c0_59, %c0_60] : memref<4x32xf32, #tpu.memory_space<vmem>>, vector<4x32xf32>
    tpu.vector_store %arg7[%c0_59, %c0_60], %319 {strides = array<i32>} : memref<4x32xf32, #tpu.memory_space<vmem>>, vector<4x32xf32>,
    return
  }
  func.func @transform_0(%arg0: i32) -> (i32, i32, i32) {
    %c0_i32 = arith.constant 0 : i32
    %c0_i32_0 = arith.constant 0 : i32
    %c0_i32_1 = arith.constant 0 : i32
    return %arg0, %c0_i32, %c0_i32_0 : i32, i32, i32
  }
  func.func @transform_1(%arg0: i32) -> (i32, i32) {
    %c0_i32 = arith.constant 0 : i32
    %c0_i32_0 = arith.constant 0 : i32
    %c0_i32_1 = arith.constant 0 : i32
    return %c0_i32, %c0_i32_0 : i32, i32
  }
  func.func @transform_2(%arg0: i32) -> (i32, i32) {
    %c0_i32 = arith.constant 0 : i32
    %c0_i32_0 = arith.constant 0 : i32
    %c0_i32_1 = arith.constant 0 : i32
    return %c0_i32, %c0_i32_0 : i32, i32
  }
  func.func @transform_3(%arg0: i32) -> (i32, i32) {
    %c0_i32 = arith.constant 0 : i32
    %c0_i32_0 = arith.constant 0 : i32
    %c0_i32_1 = arith.constant 0 : i32
    return %c0_i32, %c0_i32_0 : i32, i32
  }
  func.func @transform_4(%arg0: i32) -> (i32, i32) {
    %c0_i32 = arith.constant 0 : i32
    %c0_i32_0 = arith.constant 0 : i32
    %c0_i32_1 = arith.constant 0 : i32
    return %c0_i32, %c0_i32_0 : i32, i32
  }
  func.func @transform_5(%arg0: i32) -> (i32, i32) {
    %c0_i32 = arith.constant 0 : i32
    %c0_i32_0 = arith.constant 0 : i32
    %c0_i32_1 = arith.constant 0 : i32
    return %c0_i32, %c0_i32_0 : i32, i32
  }
  func.func @transform_6(%arg0: i32) -> (i32, i32) {
    %c0_i32 = arith.constant 0 : i32
    %c0_i32_0 = arith.constant 0 : i32
    %c0_i32_1 = arith.constant 0 : i32
    return %c0_i32, %c0_i32_0 : i32, i32
  }
}

</mosaic_0001>

<llo_original>
// kernel: tpu_custom_call.1
$region0: #{tpu_custom_call.1}
  #allocation0 [shape = 'u32[]', space=smem, size = 0x4, offset = 0x4, fixed_abs, tag = 'smem constant byte address 0x4 - core index']
  #allocation1 [shape = 'u32[72,128]{1,0:T(1,128)}', space=vmem, size = 0x9000, scoped, tag = 'internal scratch']
  %s0 = inlined_call_operand.hbm [shape: f32[8,4,128], index: 0, kind: input, shape index: {}]
  %s1 = inlined_call_operand.vmem [shape: s32[4,1], index: 1, kind: input, shape index: {}]
  %s2 = inlined_call_operand.hbm [shape: f32[32,128], index: 2, kind: input, shape index: {}]
  %s3 = inlined_call_operand.vmem [shape: f32[4,32], index: 3, kind: input, shape index: {}]
  %s4 = inlined_call_operand.vmem [shape: f32[4,32], index: 4, kind: input, shape index: {}]
  %s5 = inlined_call_operand.hbm [shape: f32[4,32], index: 5, kind: output, shape index: {0}]
  %s6 = inlined_call_operand.hbm [shape: f32[4,32], index: 6, kind: output, shape index: {1}]
  %7 = xla_tuple %s5, %s6
  %s8 = sld [smem:[#allocation0]]
  $region50: #{tpu_custom_call.1} parent=0
    _
  %s10 = ssub.s32 1, %s8
  %s11 = scalar_select 0, %s10, %s8
  $region1: #{tpu_custom_call.1} parent=0
    #allocation2 [shape = 'u8[16384]{0}', space=vmem, size = 0x4000, scoped, tag = 'input window, operand 0, single buffered']
    #allocation3 [shape = 's32[1]{0}', space=sflag, size = 0x4, scoped, tag = 'scoped memory for tpu_custom_call.1']
    #allocation4 [shape = 's32[1]{0}', space=sflag, size = 0x4, scoped, tag = 'scoped memory for tpu_custom_call.1']
    #allocation5 [shape = 'u8[16384]{0}', space=vmem, size = 0x4000, scoped, tag = 'input window, operand 2, single buffered']
    #allocation6 [shape = 's32[1]{0}', space=sflag, size = 0x4, scoped, tag = 'scoped memory for tpu_custom_call.1']
    #allocation7 [shape = 'u8[2048]{0}', space=vmem, size = 0x800, scoped, tag = 'output window, operand 0, single buffered']
    #allocation8 [shape = 'u8[2048]{0}', space=vmem, size = 0x800, scoped, tag = 'output window, operand 1, single buffered']
    #allocation9 [shape = 's32[1]{0}', space=sflag, size = 0x4, scoped, tag = 'scoped memory for tpu_custom_call.1']
    %12 = vsyncpa [#allocation3], 0
    %13 = vsyncpa [#allocation6], 0
    %14 = vsyncpa [#allocation4], 0
    %15 = vsyncpa [#allocation9], 0
    // Predicated region
    $region2: #{tpu_custom_call.1} parent=1 // pred_check
      _
    $region3: #{tpu_custom_call.1} parent=1 // pred_check_branch
      %17 = sbr.rel (0) target = $region5
    $region4: #{tpu_custom_call.1} parent=1 // pred_region
      %19 = vsyncadd [#allocation3], 0
      %s20 = sshll.u32 %s0, 4
      %s21 = int_to_ptr.hbm [resolvable:$true] %s20
      %s22 = sshll.u32 [#allocation2], 4
      %s23 = int_to_ptr.vmem [resolvable:$true] %s22
      %28 = dma.hbm_to_vmem [thread:$0]  %s21, 512, %s23, [#allocation3], 64, 64, 4
    $region5: #{tpu_custom_call.1} parent=1 // pred_fallthru
      _
    // Predicated region
    $region6: #{tpu_custom_call.1} parent=1 // pred_check
      _
    $region7: #{tpu_custom_call.1} parent=1 // pred_check_branch
      %30 = sbr.rel (0) target = $region9
    $region8: #{tpu_custom_call.1} parent=1 // pred_region
      _
    $region9: #{tpu_custom_call.1} parent=1 // pred_fallthru
      _
    // Predicated region
    $region10: #{tpu_custom_call.1} parent=1 // pred_check
      _
    $region11: #{tpu_custom_call.1} parent=1 // pred_check_branch
      %32 = sbr.rel (0) target = $region13
    $region12: #{tpu_custom_call.1} parent=1 // pred_region
      %34 = vsyncadd [#allocation6], 0
      %s35 = sshll.u32 %s2, 4
      %s36 = int_to_ptr.hbm [resolvable:$true] %s35
      %s37 = sshll.u32 [#allocation5], 4
      %s38 = int_to_ptr.vmem [resolvable:$true] %s37
      %43 = dma.hbm_to_vmem [thread:$0]  %s36, 512, %s38, [#allocation6], 128, 128, 8
    $region13: #{tpu_custom_call.1} parent=1 // pred_fallthru
      _
    // Predicated region
    $region14: #{tpu_custom_call.1} parent=1 // pred_check
      _
    $region15: #{tpu_custom_call.1} parent=1 // pred_check_branch
      %45 = sbr.rel (0) target = $region17
    $region16: #{tpu_custom_call.1} parent=1 // pred_region
      _
    $region17: #{tpu_custom_call.1} parent=1 // pred_fallthru
      _
    // Predicated region
    $region18: #{tpu_custom_call.1} parent=1 // pred_check
      _
    $region19: #{tpu_custom_call.1} parent=1 // pred_check_branch
      %47 = sbr.rel (0) target = $region21
    $region20: #{tpu_custom_call.1} parent=1 // pred_region
      _
    $region21: #{tpu_custom_call.1} parent=1 // pred_fallthru
      _
    // Predicated region
    $region22: #{tpu_custom_call.1} parent=1 // pred_check
      _
    $region23: #{tpu_custom_call.1} parent=1 // pred_check_branch
      %49 = sbr.rel (0) target = $region25
    $region24: #{tpu_custom_call.1} parent=1 // pred_region
      %51 = dma.done [#allocation3], 512
    $region25: #{tpu_custom_call.1} parent=1 // pred_fallthru
      _
    // Predicated region
    $region26: #{tpu_custom_call.1} parent=1 // pred_check
      _
    $region27: #{tpu_custom_call.1} parent=1 // pred_check_branch
      %53 = sbr.rel (0) target = $region29
    $region28: #{tpu_custom_call.1} parent=1 // pred_region
      %55 = dma.done [#allocation6], 512
    $region29: #{tpu_custom_call.1} parent=1 // pred_fallthru
      _
    %p56 = scmp.eq.s32.totalorder 0, 0
    // Predicated region
    $region30: #{tpu_custom_call.1} parent=1 // pred_check
      %p57 = pneg %p56
    $region31: #{tpu_custom_call.1} parent=1 // pred_check_branch
      %59 = sbr.rel (%p57) target = $region33
    $region32: #{tpu_custom_call.1} parent=1 // pred_region
      %v60 = vld [vmem:[%s3] sm:$0xf]
      %vm61 = vcmask 257024
      %62 = vst.msk [vmem:[#allocation7] sm:$0xf] %vm61, %v60
      %v63 = vld [vmem:[%s4] sm:$0xf]
      %64 = vst.msk [vmem:[#allocation8] sm:$0xf] %vm61, %v63
    $region33: #{tpu_custom_call.1} parent=1 // pred_fallthru
      _
    %v65 = vld [vmem:[%s1] sm:$0xf]
    %v66 = vld [vmem:[#allocation5] sm:$0xff]
    %v67 = vld [vmem:[#allocation5 + $0x8] sm:$0xff]
    %v68 = vld [vmem:[#allocation5 + $0x10] sm:$0xff]
    %v69 = vld [vmem:[#allocation5 + $0x18] sm:$0xff]
    %s70 = smul.u32 0, 8
    %v71 = vld [vmem:[#allocation7] sm:$0xf]
    %v72 = vld [vmem:[#allocation8] sm:$0xf]
    %v73 = vld [vmem:[#allocation2] sm:$0xf]
    %vm74 = vcmask 261120
    %v76 = vsel %vm74, %v71, 0
    %78 = vmatpush.msra.mxu0 0.0
    %79 = vmatpush.msra.mxu0 0.0
    %80 = vmatpush.msra.mxu0 0.0
    %81 = vmatpush.msra.mxu0 0.0
    %82 = vmatpush.msra.mxu0 0.0
    %83 = vmatpush.msra.mxu0 0.0
    %84 = vmatpush.msra.mxu0 0.0
    %85 = vmatpush.msra.mxu0 0.0
    %86 = vmatpush.msra.mxu0 0.0
    %87 = vmatpush.msra.mxu0 0.0
    %88 = vmatpush.msra.mxu0 0.0
    %89 = vmatpush.msra.mxu0 0.0
    %90 = vmatpush.msra.mxu0 %v69
    %91 = vmatpush.msra.mxu0 %v68
    %92 = vmatpush.msra.mxu0 %v67
    %93 = vmatpush.msra.mxu0 %v66
    %94 = vmatmul.f32.gmra.mxu0 %v76
    %v95 = vpop.f32.mrf.mxu0
    %v96 = vadd.f32 0.0, %v95
    %97 = vdwg.mxu0
    %v98 = vadd.f32 %v73, %v96
    %v99 = vxor.u32 %v98, 2147483648
    %v100 = vmul.f32 %v99, 1.442695
    %v101 = vpow.pop %v100
    %v102 = vadd.f32 %v101, 1.0
    %v103 = vrcp.pop %v102
    %v104 = vmul.f32 %v102, %v103
    %v105 = vsub.f32 1.0, %v104
    %v106 = vmul.f32 %v103, %v105
    %v107 = vadd.f32 %v103, %v106
    %vm108 = vweird.f32 %v102
    %vm109 = vweird.f32 %v103
    %vm110 = vmor %vm108, %vm109
    %v111 = vsel %vm110, %v103, %v107
    %v112 = vand.u32 2147483647, %v102
    %vm113 = vcmp.eq.f32.partialorder %v112, 8.507059e+37
    %v114 = vand.u32 %v102, 2147483648
    %v115 = vor.u32 1.1754944e-38, %v114
    %v116 = vsel %vm113, %v115, %v111
    %v117 = vmul.f32 1.0, %v116
    %v118 = vtanh.pop %v98
    %120 = vrot.lane.b32.xlu0 %v72, 32
    %v121 = vpop.permute.xlu0 %120
    %v123 = vmul.f32 %v117, %v121
    %125 = vrot.lane.b32.xlu0 %v118, 64
    %v126 = vpop.permute.xlu0 %125
    %v128 = vmul.f32 %v117, %v126
    %130 = vrot.lane.b32.xlu0 %v128, 32
    %v131 = vpop.permute.xlu0 %130
    %v133 = vadd.f32 %v123, %v131
    %v134 = vtanh.pop %v133
    %136 = vrot.lane.b32.xlu0 %v134, 64
    %v137 = vpop.permute.xlu0 %136
    %v139 = vmul.f32 %v117, %v137
    %v140 = vstv %s70
    %vm141 = vcmp.lt.s32.totalorder %v140, %v65
    %v142 = vsel %vm141, 1, 0
    %143 = vset.pattern.permute.xlu0 0
    %144 = vperm.xlu0 %143, %v142
    %v145 = vpop.permute.xlu0 %144
    %vm146 = vcmp.eq.s32.totalorder %v145, 1
    %147 = vrot.lane.b32.xlu0 %v71, 96
    %v148 = vpop.permute.xlu0 %147
    %v150 = vsel %vm146, %v139, %v148
    %v151 = vsel %vm146, %v133, %v121
    %s152 = scalar_lea.vmem [#allocation2], 4
    %v153 = vld [vmem:[%s152] sm:$0xf]
    %155 = vrot.lane.b32.xlu0 %v150, 32
    %v156 = vpop.permute.xlu0 %155
    %v157 = vsel %vm74, %v156, 0
    %159 = vmatpush.msra.mxu0 0.0
    %160 = vmatpush.msra.mxu0 0.0
    %161 = vmatpush.msra.mxu0 0.0
    %162 = vmatpush.msra.mxu0 0.0
    %163 = vmatpush.msra.mxu0 0.0
    %164 = vmatpush.msra.mxu0 0.0
    %165 = vmatpush.msra.mxu0 0.0
    %166 = vmatpush.msra.mxu0 0.0
    %167 = vmatpush.msra.mxu0 0.0
    %168 = vmatpush.msra.mxu0 0.0
    %169 = vmatpush.msra.mxu0 0.0
    %170 = vmatpush.msra.mxu0 0.0
    %171 = vmatpush.msra.mxu0 %v69
    %172 = vmatpush.msra.mxu0 %v68
    %173 = vmatpush.msra.mxu0 %v67
    %174 = vmatpush.msra.mxu0 %v66
    %175 = vmatmul.f32.gmra.mxu0 %v157
    %v176 = vpop.f32.mrf.mxu0
    %v177 = vadd.f32 0.0, %v176
    %178 = vdwg.mxu0
    %v179 = vadd.f32 %v153, %v177
    %v180 = vxor.u32 %v179, 2147483648
    %v181 = vmul.f32 %v180, 1.442695
    %v182 = vpow.pop %v181
    %v183 = vadd.f32 %v182, 1.0
    %v184 = vrcp.pop %v183
    %v185 = vmul.f32 %v183, %v184
    %v186 = vsub.f32 1.0, %v185
    %v187 = vmul.f32 %v184, %v186
    %v188 = vadd.f32 %v184, %v187
    %vm189 = vweird.f32 %v183
    %vm190 = vweird.f32 %v184
    %vm191 = vmor %vm189, %vm190
    %v192 = vsel %vm191, %v184, %v188
    %v193 = vand.u32 2147483647, %v183
    %vm194 = vcmp.eq.f32.partialorder %v193, 8.507059e+37
    %v195 = vand.u32 %v183, 2147483648
    %v196 = vor.u32 1.1754944e-38, %v195
    %v197 = vsel %vm194, %v196, %v192
    %v198 = vmul.f32 1.0, %v197
    %v199 = vtanh.pop %v179
    %v200 = vmul.f32 %v198, %v151
    %202 = vrot.lane.b32.xlu0 %v199, 64
    %v203 = vpop.permute.xlu0 %202
    %v205 = vmul.f32 %v198, %v203
    %207 = vrot.lane.b32.xlu0 %v205, 32
    %v208 = vpop.permute.xlu0 %207
    %v210 = vadd.f32 %v200, %v208
    %v211 = vtanh.pop %v210
    %213 = vrot.lane.b32.xlu0 %v211, 64
    %v214 = vpop.permute.xlu0 %213
    %v216 = vmul.f32 %v198, %v214
    %s217 = sadd.s32 %s70, 1
    %v218 = vstv %s217
    %vm219 = vcmp.lt.s32.totalorder %v218, %v65
    %v220 = vsel %vm219, 1, 0
    %221 = vset.pattern.permute.xlu0 0
    %222 = vperm.xlu0 %221, %v220
    %v223 = vpop.permute.xlu0 %222
    %vm224 = vcmp.eq.s32.totalorder %v223, 1
    %v225 = vsel %vm224, %v216, %v150
    %v226 = vsel %vm224, %v210, %v151
    %s227 = scalar_lea.vmem [#allocation2], 8
    %v228 = vld [vmem:[%s227] sm:$0xf]
    %230 = vrot.lane.b32.xlu0 %v225, 32
    %v231 = vpop.permute.xlu0 %230
    %v232 = vsel %vm74, %v231, 0
    %234 = vmatpush.msra.mxu0 0.0
    %235 = vmatpush.msra.mxu0 0.0
    %236 = vmatpush.msra.mxu0 0.0
    %237 = vmatpush.msra.mxu0 0.0
    %238 = vmatpush.msra.mxu0 0.0
    %239 = vmatpush.msra.mxu0 0.0
    %240 = vmatpush.msra.mxu0 0.0
    %241 = vmatpush.msra.mxu0 0.0
    %242 = vmatpush.msra.mxu0 0.0
    %243 = vmatpush.msra.mxu0 0.0
    %244 = vmatpush.msra.mxu0 0.0
    %245 = vmatpush.msra.mxu0 0.0
    %246 = vmatpush.msra.mxu0 %v69
    %247 = vmatpush.msra.mxu0 %v68
    %248 = vmatpush.msra.mxu0 %v67
    %249 = vmatpush.msra.mxu0 %v66
    %250 = vmatmul.f32.gmra.mxu0 %v232
    %v251 = vpop.f32.mrf.mxu0
    %v252 = vadd.f32 0.0, %v251
    %253 = vdwg.mxu0
    %v254 = vadd.f32 %v228, %v252
    %v255 = vxor.u32 %v254, 2147483648
    %v256 = vmul.f32 %v255, 1.442695
    %v257 = vpow.pop %v256
    %v258 = vadd.f32 %v257, 1.0
    %v259 = vrcp.pop %v258
    %v260 = vmul.f32 %v258, %v259
    %v261 = vsub.f32 1.0, %v260
    %v262 = vmul.f32 %v259, %v261
    %v263 = vadd.f32 %v259, %v262
    %vm264 = vweird.f32 %v258
    %vm265 = vweird.f32 %v259
    %vm266 = vmor %vm264, %vm265
    %v267 = vsel %vm266, %v259, %v263
    %v268 = vand.u32 2147483647, %v258
    %vm269 = vcmp.eq.f32.partialorder %v268, 8.507059e+37
    %v270 = vand.u32 %v258, 2147483648
    %v271 = vor.u32 1.1754944e-38, %v270
    %v272 = vsel %vm269, %v271, %v267
    %v273 = vmul.f32 1.0, %v272
    %v274 = vtanh.pop %v254
    %v275 = vmul.f32 %v273, %v226
    %277 = vrot.lane.b32.xlu0 %v274, 64
    %v278 = vpop.permute.xlu0 %277
    %v280 = vmul.f32 %v273, %v278
    %282 = vrot.lane.b32.xlu0 %v280, 32
    %v283 = vpop.permute.xlu0 %282
    %v285 = vadd.f32 %v275, %v283
    %v286 = vtanh.pop %v285
    %288 = vrot.lane.b32.xlu0 %v286, 64
    %v289 = vpop.permute.xlu0 %288
    %v291 = vmul.f32 %v273, %v289
    %s292 = sadd.s32 %s70, 2
    %v293 = vstv %s292
    %vm294 = vcmp.lt.s32.totalorder %v293, %v65
    %v295 = vsel %vm294, 1, 0
    %296 = vset.pattern.permute.xlu0 0
    %297 = vperm.xlu0 %296, %v295
    %v298 = vpop.permute.xlu0 %297
    %vm299 = vcmp.eq.s32.totalorder %v298, 1
    %v300 = vsel %vm299, %v291, %v225
    %v301 = vsel %vm299, %v285, %v226
    %s302 = scalar_lea.vmem [#allocation2], 12
    %v303 = vld [vmem:[%s302] sm:$0xf]
    %305 = vrot.lane.b32.xlu0 %v300, 32
    %v306 = vpop.permute.xlu0 %305
    %v307 = vsel %vm74, %v306, 0
    %309 = vmatpush.msra.mxu0 0.0
    %310 = vmatpush.msra.mxu0 0.0
    %311 = vmatpush.msra.mxu0 0.0
    %312 = vmatpush.msra.mxu0 0.0
    %313 = vmatpush.msra.mxu0 0.0
    %314 = vmatpush.msra.mxu0 0.0
    %315 = vmatpush.msra.mxu0 0.0
    %316 = vmatpush.msra.mxu0 0.0
    %317 = vmatpush.msra.mxu0 0.0
    %318 = vmatpush.msra.mxu0 0.0
    %319 = vmatpush.msra.mxu0 0.0
    %320 = vmatpush.msra.mxu0 0.0
    %321 = vmatpush.msra.mxu0 %v69
    %322 = vmatpush.msra.mxu0 %v68
    %323 = vmatpush.msra.mxu0 %v67
    %324 = vmatpush.msra.mxu0 %v66
    %325 = vmatmul.f32.gmra.mxu0 %v307
    %v326 = vpop.f32.mrf.mxu0
    %v327 = vadd.f32 0.0, %v326
    %328 = vdwg.mxu0
    %v329 = vadd.f32 %v303, %v327
    %v330 = vxor.u32 %v329, 2147483648
    %v331 = vmul.f32 %v330, 1.442695
    %v332 = vpow.pop %v331
    %v333 = vadd.f32 %v332, 1.0
    %v334 = vrcp.pop %v333
    %v335 = vmul.f32 %v333, %v334
    %v336 = vsub.f32 1.0, %v335
    %v337 = vmul.f32 %v334, %v336
    %v338 = vadd.f32 %v334, %v337
    %vm339 = vweird.f32 %v333
    %vm340 = vweird.f32 %v334
    %vm341 = vmor %vm339, %vm340
    %v342 = vsel %vm341, %v334, %v338
    %v343 = vand.u32 2147483647, %v333
    %vm344 = vcmp.eq.f32.partialorder %v343, 8.507059e+37
    %v345 = vand.u32 %v333, 2147483648
    %v346 = vor.u32 1.1754944e-38, %v345
    %v347 = vsel %vm344, %v346, %v342
    %v348 = vmul.f32 1.0, %v347
    %v349 = vtanh.pop %v329
    %v350 = vmul.f32 %v348, %v301
    %352 = vrot.lane.b32.xlu0 %v349, 64
    %v353 = vpop.permute.xlu0 %352
    %v355 = vmul.f32 %v348, %v353
    %357 = vrot.lane.b32.xlu0 %v355, 32
    %v358 = vpop.permute.xlu0 %357
    %v360 = vadd.f32 %v350, %v358
    %v361 = vtanh.pop %v360
    %363 = vrot.lane.b32.xlu0 %v361, 64
    %v364 = vpop.permute.xlu0 %363
    %v366 = vmul.f32 %v348, %v364
    %s367 = sadd.s32 %s70, 3
    %v368 = vstv %s367
    %vm369 = vcmp.lt.s32.totalorder %v368, %v65
    %v370 = vsel %vm369, 1, 0
    %371 = vset.pattern.permute.xlu0 0
    %372 = vperm.xlu0 %371, %v370
    %v373 = vpop.permute.xlu0 %372
    %vm374 = vcmp.eq.s32.totalorder %v373, 1
    %v375 = vsel %vm374, %v366, %v300
    %v376 = vsel %vm374, %v360, %v301
    %s377 = scalar_lea.vmem [#allocation2], 16
    %v378 = vld [vmem:[%s377] sm:$0xf]
    %380 = vrot.lane.b32.xlu0 %v375, 32
    %v381 = vpop.permute.xlu0 %380
    %v382 = vsel %vm74, %v381, 0
    %384 = vmatpush.msra.mxu0 0.0
    %385 = vmatpush.msra.mxu0 0.0
    %386 = vmatpush.msra.mxu0 0.0
    %387 = vmatpush.msra.mxu0 0.0
    %388 = vmatpush.msra.mxu0 0.0
    %389 = vmatpush.msra.mxu0 0.0
    %390 = vmatpush.msra.mxu0 0.0
    %391 = vmatpush.msra.mxu0 0.0
    %392 = vmatpush.msra.mxu0 0.0
    %393 = vmatpush.msra.mxu0 0.0
    %394 = vmatpush.msra.mxu0 0.0
    %395 = vmatpush.msra.mxu0 0.0
    %396 = vmatpush.msra.mxu0 %v69
    %397 = vmatpush.msra.mxu0 %v68
    %398 = vmatpush.msra.mxu0 %v67
    %399 = vmatpush.msra.mxu0 %v66
    %400 = vmatmul.f32.gmra.mxu0 %v382
    %v401 = vpop.f32.mrf.mxu0
    %v402 = vadd.f32 0.0, %v401
    %403 = vdwg.mxu0
    %v404 = vadd.f32 %v378, %v402
    %v405 = vxor.u32 %v404, 2147483648
    %v406 = vmul.f32 %v405, 1.442695
    %v407 = vpow.pop %v406
    %v408 = vadd.f32 %v407, 1.0
    %v409 = vrcp.pop %v408
    %v410 = vmul.f32 %v408, %v409
    %v411 = vsub.f32 1.0, %v410
    %v412 = vmul.f32 %v409, %v411
    %v413 = vadd.f32 %v409, %v412
    %vm414 = vweird.f32 %v408
    %vm415 = vweird.f32 %v409
    %vm416 = vmor %vm414, %vm415
    %v417 = vsel %vm416, %v409, %v413
    %v418 = vand.u32 2147483647, %v408
    %vm419 = vcmp.eq.f32.partialorder %v418, 8.507059e+37
    %v420 = vand.u32 %v408, 2147483648
    %v421 = vor.u32 1.1754944e-38, %v420
    %v422 = vsel %vm419, %v421, %v417
    %v423 = vmul.f32 1.0, %v422
    %v424 = vtanh.pop %v404
    %v425 = vmul.f32 %v423, %v376
    %427 = vrot.lane.b32.xlu0 %v424, 64
    %v428 = vpop.permute.xlu0 %427
    %v430 = vmul.f32 %v423, %v428
    %432 = vrot.lane.b32.xlu0 %v430, 32
    %v433 = vpop.permute.xlu0 %432
    %v435 = vadd.f32 %v425, %v433
    %v436 = vtanh.pop %v435
    %438 = vrot.lane.b32.xlu0 %v436, 64
    %v439 = vpop.permute.xlu0 %438
    %v441 = vmul.f32 %v423, %v439
    %s442 = sadd.s32 %s70, 4
    %v443 = vstv %s442
    %vm444 = vcmp.lt.s32.totalorder %v443, %v65
    %v445 = vsel %vm444, 1, 0
    %446 = vset.pattern.permute.xlu0 0
    %447 = vperm.xlu0 %446, %v445
    %v448 = vpop.permute.xlu0 %447
    %vm449 = vcmp.eq.s32.totalorder %v448, 1
    %v450 = vsel %vm449, %v441, %v375
    %v451 = vsel %vm449, %v435, %v376
    %s452 = scalar_lea.vmem [#allocation2], 20
    %v453 = vld [vmem:[%s452] sm:$0xf]
    %455 = vrot.lane.b32.xlu0 %v450, 32
    %v456 = vpop.permute.xlu0 %455
    %v457 = vsel %vm74, %v456, 0
    %459 = vmatpush.msra.mxu0 0.0
    %460 = vmatpush.msra.mxu0 0.0
    %461 = vmatpush.msra.mxu0 0.0
    %462 = vmatpush.msra.mxu0 0.0
    %463 = vmatpush.msra.mxu0 0.0
    %464 = vmatpush.msra.mxu0 0.0
    %465 = vmatpush.msra.mxu0 0.0
    %466 = vmatpush.msra.mxu0 0.0
    %467 = vmatpush.msra.mxu0 0.0
    %468 = vmatpush.msra.mxu0 0.0
    %469 = vmatpush.msra.mxu0 0.0
    %470 = vmatpush.msra.mxu0 0.0
    %471 = vmatpush.msra.mxu0 %v69
    %472 = vmatpush.msra.mxu0 %v68
    %473 = vmatpush.msra.mxu0 %v67
    %474 = vmatpush.msra.mxu0 %v66
    %475 = vmatmul.f32.gmra.mxu0 %v457
    %v476 = vpop.f32.mrf.mxu0
    %v477 = vadd.f32 0.0, %v476
    %478 = vdwg.mxu0
    %v479 = vadd.f32 %v453, %v477
    %v480 = vxor.u32 %v479, 2147483648
    %v481 = vmul.f32 %v480, 1.442695
    %v482 = vpow.pop %v481
    %v483 = vadd.f32 %v482, 1.0
    %v484 = vrcp.pop %v483
    %v485 = vmul.f32 %v483, %v484
    %v486 = vsub.f32 1.0, %v485
    %v487 = vmul.f32 %v484, %v486
    %v488 = vadd.f32 %v484, %v487
    %vm489 = vweird.f32 %v483
    %vm490 = vweird.f32 %v484
    %vm491 = vmor %vm489, %vm490
    %v492 = vsel %vm491, %v484, %v488
    %v493 = vand.u32 2147483647, %v483
    %vm494 = vcmp.eq.f32.partialorder %v493, 8.507059e+37
    %v495 = vand.u32 %v483, 2147483648
    %v496 = vor.u32 1.1754944e-38, %v495
    %v497 = vsel %vm494, %v496, %v492
    %v498 = vmul.f32 1.0, %v497
    %v499 = vtanh.pop %v479
    %v500 = vmul.f32 %v498, %v451
    %502 = vrot.lane.b32.xlu0 %v499, 64
    %v503 = vpop.permute.xlu0 %502
    %v505 = vmul.f32 %v498, %v503
    %507 = vrot.lane.b32.xlu0 %v505, 32
    %v508 = vpop.permute.xlu0 %507
    %v510 = vadd.f32 %v500, %v508
    %v511 = vtanh.pop %v510
    %513 = vrot.lane.b32.xlu0 %v511, 64
    %v514 = vpop.permute.xlu0 %513
    %v516 = vmul.f32 %v498, %v514
    %s517 = sadd.s32 %s70, 5
    %v518 = vstv %s517
    %vm519 = vcmp.lt.s32.totalorder %v518, %v65
    %v520 = vsel %vm519, 1, 0
    %521 = vset.pattern.permute.xlu0 0
    %522 = vperm.xlu0 %521, %v520
    %v523 = vpop.permute.xlu0 %522
    %vm524 = vcmp.eq.s32.totalorder %v523, 1
    %v525 = vsel %vm524, %v516, %v450
    %v526 = vsel %vm524, %v510, %v451
    %s527 = scalar_lea.vmem [#allocation2], 24
    %v528 = vld [vmem:[%s527] sm:$0xf]
    %530 = vrot.lane.b32.xlu0 %v525, 32
    %v531 = vpop.permute.xlu0 %530
    %v532 = vsel %vm74, %v531, 0
    %534 = vmatpush.msra.mxu0 0.0
    %535 = vmatpush.msra.mxu0 0.0
    %536 = vmatpush.msra.mxu0 0.0
    %537 = vmatpush.msra.mxu0 0.0
    %538 = vmatpush.msra.mxu0 0.0
    %539 = vmatpush.msra.mxu0 0.0
    %540 = vmatpush.msra.mxu0 0.0
    %541 = vmatpush.msra.mxu0 0.0
    %542 = vmatpush.msra.mxu0 0.0
    %543 = vmatpush.msra.mxu0 0.0
    %544 = vmatpush.msra.mxu0 0.0
    %545 = vmatpush.msra.mxu0 0.0
    %546 = vmatpush.msra.mxu0 %v69
    %547 = vmatpush.msra.mxu0 %v68
    %548 = vmatpush.msra.mxu0 %v67
    %549 = vmatpush.msra.mxu0 %v66
    %550 = vmatmul.f32.gmra.mxu0 %v532
    %v551 = vpop.f32.mrf.mxu0
    %v552 = vadd.f32 0.0, %v551
    %553 = vdwg.mxu0
    %v554 = vadd.f32 %v528, %v552
    %v555 = vxor.u32 %v554, 2147483648
    %v556 = vmul.f32 %v555, 1.442695
    %v557 = vpow.pop %v556
    %v558 = vadd.f32 %v557, 1.0
    %v559 = vrcp.pop %v558
    %v560 = vmul.f32 %v558, %v559
    %v561 = vsub.f32 1.0, %v560
    %v562 = vmul.f32 %v559, %v561
    %v563 = vadd.f32 %v559, %v562
    %vm564 = vweird.f32 %v558
    %vm565 = vweird.f32 %v559
    %vm566 = vmor %vm564, %vm565
    %v567 = vsel %vm566, %v559, %v563
    %v568 = vand.u32 2147483647, %v558
    %vm569 = vcmp.eq.f32.partialorder %v568, 8.507059e+37
    %v570 = vand.u32 %v558, 2147483648
    %v571 = vor.u32 1.1754944e-38, %v570
    %v572 = vsel %vm569, %v571, %v567
    %v573 = vmul.f32 1.0, %v572
    %v574 = vtanh.pop %v554
    %v575 = vmul.f32 %v573, %v526
    %577 = vrot.lane.b32.xlu0 %v574, 64
    %v578 = vpop.permute.xlu0 %577
    %v580 = vmul.f32 %v573, %v578
    %582 = vrot.lane.b32.xlu0 %v580, 32
    %v583 = vpop.permute.xlu0 %582
    %v585 = vadd.f32 %v575, %v583
    %v586 = vtanh.pop %v585
    %588 = vrot.lane.b32.xlu0 %v586, 64
    %v589 = vpop.permute.xlu0 %588
    %v591 = vmul.f32 %v573, %v589
    %s592 = sadd.s32 %s70, 6
    %v593 = vstv %s592
    %vm594 = vcmp.lt.s32.totalorder %v593, %v65
    %v595 = vsel %vm594, 1, 0
    %596 = vset.pattern.permute.xlu0 0
    %597 = vperm.xlu0 %596, %v595
    %v598 = vpop.permute.xlu0 %597
    %vm599 = vcmp.eq.s32.totalorder %v598, 1
    %v600 = vsel %vm599, %v591, %v525
    %v601 = vsel %vm599, %v585, %v526
    %s602 = scalar_lea.vmem [#allocation2], 28
    %v603 = vld [vmem:[%s602] sm:$0xf]
    %605 = vrot.lane.b32.xlu0 %v600, 32
    %v606 = vpop.permute.xlu0 %605
    %v607 = vsel %vm74, %v606, 0
    %609 = vmatpush.msra.mxu0 0.0
    %610 = vmatpush.msra.mxu0 0.0
    %611 = vmatpush.msra.mxu0 0.0
    %612 = vmatpush.msra.mxu0 0.0
    %613 = vmatpush.msra.mxu0 0.0
    %614 = vmatpush.msra.mxu0 0.0
    %615 = vmatpush.msra.mxu0 0.0
    %616 = vmatpush.msra.mxu0 0.0
    %617 = vmatpush.msra.mxu0 0.0
    %618 = vmatpush.msra.mxu0 0.0
    %619 = vmatpush.msra.mxu0 0.0
    %620 = vmatpush.msra.mxu0 0.0
    %621 = vmatpush.msra.mxu0 %v69
    %622 = vmatpush.msra.mxu0 %v68
    %623 = vmatpush.msra.mxu0 %v67
    %624 = vmatpush.msra.mxu0 %v66
    %625 = vmatmul.f32.gmra.mxu0 %v607
    %v626 = vpop.f32.mrf.mxu0
    %v627 = vadd.f32 0.0, %v626
    %628 = vdwg.mxu0
    %v629 = vadd.f32 %v603, %v627
    %v630 = vxor.u32 %v629, 2147483648
    %v631 = vmul.f32 %v630, 1.442695
    %v632 = vpow.pop %v631
    %v633 = vadd.f32 %v632, 1.0
    %v634 = vrcp.pop %v633
    %v635 = vmul.f32 %v633, %v634
    %v636 = vsub.f32 1.0, %v635
    %v637 = vmul.f32 %v634, %v636
    %v638 = vadd.f32 %v634, %v637
    %vm639 = vweird.f32 %v633
    %vm640 = vweird.f32 %v634
    %vm641 = vmor %vm639, %vm640
    %v642 = vsel %vm641, %v634, %v638
    %v643 = vand.u32 2147483647, %v633
    %vm644 = vcmp.eq.f32.partialorder %v643, 8.507059e+37
    %v645 = vand.u32 %v633, 2147483648
    %v646 = vor.u32 1.1754944e-38, %v645
    %v647 = vsel %vm644, %v646, %v642
    %v648 = vmul.f32 1.0, %v647
    %v649 = vtanh.pop %v629
    %v650 = vmul.f32 %v648, %v601
    %652 = vrot.lane.b32.xlu0 %v649, 64
    %v653 = vpop.permute.xlu0 %652
    %v655 = vmul.f32 %v648, %v653
    %657 = vrot.lane.b32.xlu0 %v655, 32
    %v658 = vpop.permute.xlu0 %657
    %v660 = vadd.f32 %v650, %v658
    %v661 = vtanh.pop %v660
    %663 = vrot.lane.b32.xlu0 %v661, 64
    %v664 = vpop.permute.xlu0 %663
    %v666 = vmul.f32 %v648, %v664
    %s667 = sadd.s32 %s70, 7
    %v668 = vstv %s667
    %vm669 = vcmp.lt.s32.totalorder %v668, %v65
    %v670 = vsel %vm669, 1, 0
    %671 = vset.pattern.permute.xlu0 0
    %672 = vperm.xlu0 %671, %v670
    %v673 = vpop.permute.xlu0 %672
    %vm674 = vcmp.eq.s32.totalorder %v673, 1
    %v675 = vsel %vm674, %v666, %v600
    %v676 = vsel %vm674, %v660, %v601
    %678 = vrot.lane.b32.xlu0 %v675, 32
    %v679 = vpop.permute.xlu0 %678
    %vm681 = vcmask 257024
    %682 = vst.msk [vmem:[#allocation7] sm:$0xf] %vm681, %v679
    %684 = vrot.lane.b32.xlu0 %v676, 96
    %v685 = vpop.permute.xlu0 %684
    %687 = vst.msk [vmem:[#allocation8] sm:$0xf] %vm681, %v685
    // Predicated region
    $region34: #{tpu_custom_call.1} parent=1 // pred_check
      _
    $region35: #{tpu_custom_call.1} parent=1 // pred_check_branch
      %689 = sbr.rel (0) target = $region37
    $region36: #{tpu_custom_call.1} parent=1 // pred_region
      %691 = vsyncadd [#allocation4], 0
      %s693 = sshll.u32 [#allocation7], 4
      %s694 = int_to_ptr.vmem [resolvable:$true] %s693
      %s695 = sshll.u32 %s5, 4
      %s696 = int_to_ptr.hbm [resolvable:$true] %s695
      %698 = dma.vmem_to_hbm [thread:$0]  %s694, 64, %s696, [#allocation4]
    $region37: #{tpu_custom_call.1} parent=1 // pred_fallthru
      _
    // Predicated region
    $region38: #{tpu_custom_call.1} parent=1 // pred_check
      _
    $region39: #{tpu_custom_call.1} parent=1 // pred_check_branch
      %700 = sbr.rel (0) target = $region41
    $region40: #{tpu_custom_call.1} parent=1 // pred_region
      %702 = vsyncadd [#allocation9], 0
      %s704 = sshll.u32 [#allocation8], 4
      %s705 = int_to_ptr.vmem [resolvable:$true] %s704
      %s706 = sshll.u32 %s6, 4
      %s707 = int_to_ptr.hbm [resolvable:$true] %s706
      %709 = dma.vmem_to_hbm [thread:$0]  %s705, 64, %s707, [#allocation9]
    $region41: #{tpu_custom_call.1} parent=1 // pred_fallthru
      _
    // Predicated region
    $region42: #{tpu_custom_call.1} parent=1 // pred_check
      _
    $region43: #{tpu_custom_call.1} parent=1 // pred_check_branch
      %711 = sbr.rel (0) target = $region45
    $region44: #{tpu_custom_call.1} parent=1 // pred_region
      %713 = dma.done [#allocation4], 64
    $region45: #{tpu_custom_call.1} parent=1 // pred_fallthru
      _
    // Predicated region
    $region46: #{tpu_custom_call.1} parent=1 // pred_check
      _
    $region47: #{tpu_custom_call.1} parent=1 // pred_check_branch
      %715 = sbr.rel (0) target = $region49
    $region48: #{tpu_custom_call.1} parent=1 // pred_region
      %717 = dma.done [#allocation9], 64
    $region49: #{tpu_custom_call.1} parent=1 // pred_fallthru
      _
    %718 = vsyncpa [#allocation3], 1
    %719 = vsyncpa [#allocation6], 1
    %720 = vsyncpa [#allocation4], 1
    %721 = vsyncpa [#allocation9], 1

</llo_original>
